<compile_context>
chip_gen: v7x
topology: tpu7x:2x2x1
jax: 0.10.0
libtpu: 0.0.40
codegen_flags: <defaults>
</compile_context>

<pallas_src>
import math

import jax
import jax.numpy as jnp
from jax.experimental import pallas as pl
from jax.experimental.pallas import tpu as pltpu

# ---- model dimensions (small, consistent with the module's forward) ----
HIDDEN = 32                       # hidden_size
NAME_BERT_H = 16                  # synthetic "BERT" hidden size
BERT_LAYERS = 2
NAME_DIM = NAME_BERT_H * BERT_LAYERS      # bert hidden * layers = 32
NAME_IN = NAME_DIM * 2                    # model_mode[0]==3 -> cat(left, right) = 64
CONTEXT_DIM = HIDDEN * 2                  # bi-LSTM output = 2 * hidden = 64
NUM_CLASS = 4                             # len(TARGET_CLASSES), synthetic
B = 2                                     # batch
L = 8                                     # context sequence length (after [CLS] drop)
S_NAME = 8                                # name "bert" sequence length (== L here)
BL = B * L                                # flattened batch*seq axis

SLAB_COLS = 128                           # lane-dense parameter slab width
OUT_ROWS = 8                              # lane/sublane-dense packed output tile
OUT_COLS = 128
OUT_PAYLOAD = 3 * NUM_CLASS + 2           # joint(4) | name(4) | context(4) | alpha(2)

# ---- tightly packed parameter slab layout (f32, 136 x 128 ~= 68 KiB) ----
R_PROJ_W = 0      # rows   0:64,  lanes 0:128  [w_nt | w_q | w_k | w_v]
R_WBLK = 64       # rows  64:128, second packed weight block:
                  #   lanes  0:32, rows  0:64  block-diag [w_n1 ; w_c1]
                  #   lanes 32:65, rows  0:33  biaffine W (33, 33)
                  #   lanes 72:88, rows  0:32  w_j1 (32, 16)
                  #   lanes 72:80, rows 32:64  block-diag [w_n2 ; w_c2]
                  #   lanes 88:92, rows 32:48  w_j2 (16, 4)
R_BIAS = 128      # row 128: [b_nt | b_q | b_k | b_v]
                  # row 129: [b_n1|b_c1 (0:32) | b_n2|b_c2 (32:40) | b_j1 (40:56) | b_j2 (56:60)]
SLAB_ROWS = 136

_COST = pl.CostEstimate(
    flops=2 * (2 * B * BL * SLAB_COLS               # one-hot gather matmul
               + (2 * B + BL) * NAME_IN * SLAB_COLS  # fused nt/q/k/v projection
               + B * HIDDEN * BL                     # attention scores
               + B * BL * HIDDEN                     # context vector
               + B * NAME_IN * HIDDEN                # fused nc compress stage 1
               + B * HIDDEN * 2 * NUM_CLASS          # fused nc compress stage 2
               + B * (HIDDEN + 1) * (HIDDEN + 1)     # biaffine
               + B * HIDDEN * (HIDDEN // 2)          # joint compress stage 1
               + B * (HIDDEN // 2) * NUM_CLASS),     # joint compress stage 2
    transcendentals=B * BL + B,
    bytes_accessed=4 * (SLAB_ROWS * SLAB_COLS + BL * SLAB_COLS + OUT_ROWS * OUT_COLS)
                   + 3 * B * 4,
)


def _name_context_kernel(scal_ref, acts_ref, slab_ref, out_ref):
    f32 = jnp.float32
    H = HIDDEN

    # ---- one-hot gather rows + additive attention mask from SMEM scalars ----
    flat_iota = jax.lax.broadcasted_iota(jnp.int32, (1, BL), 1)      # (1, BL)
    oh_l, oh_r, mask_rows = [], [], []
    for b in range(B):                                               # B is tiny & static
        base = b * L
        l = scal_ref[3 * b + 0]
        r = scal_ref[3 * b + 1]
        n = scal_ref[3 * b + 2]
        local = flat_iota - base
        oh_l.append((flat_iota == base + l).astype(f32))
        oh_r.append((flat_iota == base + r - 1).astype(f32))
        other_batch = (local < 0) | (local >= L)                     # cross-batch blocks
        pad = local >= n                                             # padding positions
        span = (local >= l) & (local < r)                            # target-span positions
        mask_rows.append(jnp.where(other_batch | pad | span,
                                   f32(-100000.0), f32(0.0)))
    oh_all = jnp.concatenate(oh_l + oh_r, axis=0)                    # (2B, BL)
    mask_neg = jnp.concatenate(mask_rows, axis=0)                    # (B, BL), additive

    # ---- one MXU gather: rows 0:B -> hidden at l, rows B:2B -> hidden at r-1 ----
    acts = acts_ref[...]                                             # (BL, 128)
    g = jnp.dot(oh_all, acts, preferred_element_type=f32)            # (2B, 128)
    # bi-LSTM target hidden (mode 4): forward dir at l | backward dir at r-1
    context_hidden = jnp.concatenate([g[0:B, 0:H], g[B:2 * B, H:2 * H]], axis=1)
    # "BERT" target hidden (mode 3): hidden at l | hidden at r-1
    name_hidden = jnp.concatenate([g[0:B, 2 * H:2 * H + NAME_DIM],
                                   g[B:2 * B, 2 * H:2 * H + NAME_DIM]], axis=1)

    # ---- fused projection: [name_trans | query | key | value] in ONE matmul ----
    bias = slab_ref[R_BIAS:R_BIAS + 2, :]                            # (2, 128)
    lhs = jnp.concatenate([name_hidden, context_hidden,
                           acts[:, 0:CONTEXT_DIM]], axis=0)          # (2B + BL, 64)
    proj = jnp.dot(lhs, slab_ref[R_PROJ_W:R_PROJ_W + NAME_IN, :],
                   preferred_element_type=f32) + bias[0:1, :]        # (2B + BL, 128)
    name_repr = proj[0:B, 0:H]                                       # (B, H)
    q = proj[B:2 * B, H:2 * H]                                       # (B, H)
    k_flat = proj[2 * B:2 * B + BL, 2 * H:3 * H]                     # (BL, H)
    v_flat = proj[2 * B:2 * B + BL, 3 * H:4 * H]                     # (BL, H)

    # ---- masked attention over the flattened (B*L) axis ----
    scores = jax.lax.dot_general(q, k_flat, (((1,), (1,)), ((), ())),
                                 preferred_element_type=f32)         # (B, BL)
    scores = scores * f32(1.0 / math.sqrt(H)) + mask_neg
    # masked logits are a finite -1e5 and live logits are O(1) -> skip row-max shift
    probs = jnp.exp(scores)
    denom = jnp.sum(probs, axis=-1, keepdims=True)                   # >0 for valid spans
    probs = probs * pl.reciprocal(denom, approx=True)
    # TODO(synk): nn.Dropout(0.1) on attention probs omitted (eval-mode semantics).
    context_repr = jnp.dot(probs, v_flat, preferred_element_type=f32)  # (B, H)

    # ---- fused name/context compress heads (block-diagonal weights) ----
    # TODO(synk): UTIECompress internals unavailable; modeled as Linear + ReLU.
    wblk = slab_ref[R_WBLK:R_WBLK + 64, :]                           # (64, 128)
    nc_in = jnp.concatenate([jnp.maximum(name_repr, 0.0),
                             jnp.maximum(context_repr, 0.0)], axis=1)  # (B, 2H)
    h1 = jnp.dot(nc_in, wblk[:, 0:H], preferred_element_type=f32) + bias[1:2, 0:H]
    h1 = jnp.maximum(h1, 0.0)                                        # (B, H) = [nh1 | ch1]
    nc_logits = jnp.dot(h1, wblk[H:2 * H, 72:72 + 2 * NUM_CLASS],
                        preferred_element_type=f32)
    nc_logits = nc_logits + bias[1:2, 32:32 + 2 * NUM_CLASS]         # (B, 2C) = [name | context]

    # ---- alpha = sigmoid(biaffine(context_repr, name_repr)) ----
    # TODO(synk): Biaffine assumed bias_x=bias_y=True, n_out=1 (1-augmented x^T W y).
    ones = jnp.ones((B, 1), f32)
    ctx_aug = jnp.concatenate([context_repr, ones], axis=1)          # (B, H+1)
    name_aug = jnp.concatenate([name_repr, ones], axis=1)            # (B, H+1)
    xw = jnp.dot(ctx_aug, wblk[0:H + 1, 32:32 + H + 1],
                 preferred_element_type=f32)                         # (B, H+1)
    a = jax.nn.sigmoid(jnp.sum(xw * name_aug, axis=-1, keepdims=True))  # (B, 1)
    alpha = jnp.concatenate([1.0 - a, a], axis=1)                    # (B, 2)

    # ---- joint head on reprs: weighted sum -> joint_compress ----
    joint_repr = context_repr * (1.0 - a) + name_repr * a            # (B, H)
    jh1 = jnp.dot(joint_repr, wblk[0:H, 72:72 + H // 2],
                  preferred_element_type=f32) + bias[1:2, 40:40 + H // 2]
    jh1 = jnp.maximum(jh1, 0.0)                                      # (B, H//2)
    joint_logits = jnp.dot(jh1, wblk[H:H + H // 2, 88:88 + NUM_CLASS],
                           preferred_element_type=f32)
    joint_logits = joint_logits + bias[1:2, 56:56 + NUM_CLASS]       # (B, C)

    # ---- single lane/sublane-dense packed output store ----
    lane_pad = jnp.zeros((B, OUT_COLS - OUT_PAYLOAD), f32)
    rows = jnp.concatenate([joint_logits, nc_logits, alpha, lane_pad], axis=1)  # (B, 128)
    row_pad = jnp.zeros((OUT_ROWS - B, OUT_COLS), f32)
    out_ref[...] = jnp.concatenate([rows, row_pad], axis=0)          # (8, 128)


def name_context_forward(param_slab, name_sent_hidden, lstm_sent_hidden,
                         positions, token_lengths):
    """One fused Pallas call; gathers, mask and all heads run in-kernel."""
    # Wrapper-side packing (contiguous reshapes/concats, fused by XLA):
    sent_flat = lstm_sent_hidden.reshape(BL, CONTEXT_DIM)
    name_flat = name_sent_hidden.reshape(B * S_NAME, NAME_DIM)
    lane_pad = jnp.zeros((BL, SLAB_COLS - CONTEXT_DIM - NAME_DIM), jnp.float32)
    acts = jnp.concatenate([sent_flat, name_flat, lane_pad], axis=1)   # (16, 128)
    scal = jnp.concatenate([positions.astype(jnp.int32),
                            token_lengths.astype(jnp.int32)[:, None]],
                           axis=1).reshape(-1)                         # (3B,) [l,r,n]*B

    smem = pl.BlockSpec(memory_space=pltpu.MemorySpace.SMEM)
    vmem = pl.BlockSpec(memory_space=pltpu.MemorySpace.VMEM)

    packed = pl.pallas_call(
        _name_context_kernel,
        out_shape=jax.ShapeDtypeStruct((OUT_ROWS, OUT_COLS), jnp.float32),
        in_specs=[smem, vmem, vmem],
        out_specs=vmem,
        cost_estimate=_COST,
    )(scal, acts, param_slab)

    logits = packed[:B, 0:NUM_CLASS]
    name_logits = packed[:B, NUM_CLASS:2 * NUM_CLASS]
    context_logits = packed[:B, 2 * NUM_CLASS:3 * NUM_CLASS]
    alpha = packed[:B, 3 * NUM_CLASS:3 * NUM_CLASS + 2]
    return logits, name_logits, context_logits, alpha


def init_params(key):
    """Deterministic synthetic parameters packed into one (136, 128) f32 slab."""
    ks = jax.random.split(key, 12)

    def lin(k, fan_in, fan_out):
        scale = 1.0 / math.sqrt(fan_in)
        kw, kb = jax.random.split(k)
        w = jax.random.uniform(kw, (fan_in, fan_out), jnp.float32, -scale, scale)
        b = jax.random.uniform(kb, (1, fan_out), jnp.float32, -scale, scale)
        return w, b

    w_nt, b_nt = lin(ks[0], NAME_IN, HIDDEN)               # name_trans_layer
    w_q, b_q = lin(ks[1], CONTEXT_DIM, HIDDEN)             # query_layer
    w_k, b_k = lin(ks[2], CONTEXT_DIM, HIDDEN)             # key_layer
    w_v, b_v = lin(ks[3], CONTEXT_DIM, HIDDEN)             # value_layer
    w_n1, b_n1 = lin(ks[4], HIDDEN, HIDDEN // 2)           # name_compress[0]
    w_n2, b_n2 = lin(ks[5], HIDDEN // 2, NUM_CLASS)        # name_compress[1]
    w_c1, b_c1 = lin(ks[6], HIDDEN, HIDDEN // 2)           # context_compress[0]
    w_c2, b_c2 = lin(ks[7], HIDDEN // 2, NUM_CLASS)        # context_compress[1]
    w_j1, b_j1 = lin(ks[8], HIDDEN, HIDDEN // 2)           # joint_compress[0]
    w_j2, b_j2 = lin(ks[9], HIDDEN // 2, NUM_CLASS)        # joint_compress[1]
    w_ba = jax.random.uniform(ks[10], (HIDDEN + 1, HIDDEN + 1),
                              jnp.float32, -0.1, 0.1)      # biaffine weight (n_out=1)

    proj_w = jnp.concatenate([w_nt, w_q, w_k, w_v], axis=1)            # (64, 128)
    proj_b = jnp.concatenate([b_nt, b_q, b_k, b_v], axis=1)            # (1, 128)

    nc1_w = jnp.zeros((NAME_IN, HIDDEN), jnp.float32)                  # block-diag (64, 32)
    nc1_w = nc1_w.at[0:HIDDEN, 0:HIDDEN // 2].set(w_n1)
    nc1_w = nc1_w.at[HIDDEN:2 * HIDDEN, HIDDEN // 2:HIDDEN].set(w_c1)
    nc1_b = jnp.concatenate([b_n1, b_c1], axis=1)                      # (1, 32)
    nc2_w = jnp.zeros((HIDDEN, 2 * NUM_CLASS), jnp.float32)            # block-diag (32, 8)
    nc2_w = nc2_w.at[0:HIDDEN // 2, 0:NUM_CLASS].set(w_n2)
    nc2_w = nc2_w.at[HIDDEN // 2:HIDDEN, NUM_CLASS:2 * NUM_CLASS].set(w_c2)
    nc2_b = jnp.concatenate([b_n2, b_c2], axis=1)                      # (1, 8)

    slab = jnp.zeros((SLAB_ROWS, SLAB_COLS), jnp.float32)
    slab = slab.at[R_PROJ_W:R_PROJ_W + NAME_IN, :].set(proj_w)
    slab = slab.at[R_WBLK:R_WBLK + NAME_IN, 0:HIDDEN].set(nc1_w)
    slab = slab.at[R_WBLK:R_WBLK + HIDDEN + 1, 32:32 + HIDDEN + 1].set(w_ba)
    slab = slab.at[R_WBLK:R_WBLK + HIDDEN, 72:72 + HIDDEN // 2].set(w_j1)
    slab = slab.at[R_WBLK + HIDDEN:R_WBLK + 2 * HIDDEN, 72:72 + 2 * NUM_CLASS].set(nc2_w)
    slab = slab.at[R_WBLK + HIDDEN:R_WBLK + HIDDEN + HIDDEN // 2,
                   88:88 + NUM_CLASS].set(w_j2)
    slab = slab.at[R_BIAS, :].set(proj_b[0])
    slab = slab.at[R_BIAS + 1, 0:HIDDEN].set(nc1_b[0])
    slab = slab.at[R_BIAS + 1, 32:32 + 2 * NUM_CLASS].set(nc2_b[0])
    slab = slab.at[R_BIAS + 1, 40:40 + HIDDEN // 2].set(b_j1[0])
    slab = slab.at[R_BIAS + 1, 56:56 + NUM_CLASS].set(b_j2[0])
    return slab


if __name__ == "__main__":
    key = jax.random.PRNGKey(0)
    k1, k2, kp = jax.random.split(key, 3)

    # TODO(synk): UTIEBert encoder and the packed bidirectional nn.LSTM have no
    # clean Pallas equivalent; their output hidden states are synthesized here.
    name_sent_hidden = jax.random.normal(k1, (B, S_NAME, NAME_DIM), jnp.float32)
    lstm_sent_hidden = jax.random.normal(k2, (B, L, CONTEXT_DIM), jnp.float32)
    positions = jnp.array([[1, 4], [2, 6]], dtype=jnp.int32)      # (l, r) spans
    token_lengths = jnp.array([7, 8], dtype=jnp.int32)

    param_slab = init_params(kp)

    outs = name_context_forward(param_slab, name_sent_hidden, lstm_sent_hidden,
                                positions, token_lengths)
    outs = jax.block_until_ready(outs)
    logits, name_logits, context_logits, alpha = outs
    assert logits.shape == (B, NUM_CLASS)
    assert name_logits.shape == (B, NUM_CLASS)
    assert context_logits.shape == (B, NUM_CLASS)
    assert alpha.shape == (B, 2)
    assert bool(jnp.all(jnp.isfinite(logits)))
    assert bool(jnp.all(jnp.isfinite(name_logits)))
    assert bool(jnp.all(jnp.isfinite(context_logits)))
    assert bool(jnp.all(jnp.isfinite(alpha)))
    print("KERNEL_OK")
</pallas_src>

<mosaic_0001>
module attributes {stable_mosaic.version = 11 : i64} {
  func.func @_name_context_kernel(%arg0: memref<6xi32, #tpu.memory_space<smem>>, %arg1: memref<16x128xf32, #tpu.memory_space<vmem>>, %arg2: memref<136x128xf32, #tpu.memory_space<vmem>>, %arg3: memref<8x128xf32, #tpu.memory_space<vmem>>) attributes {dimension_semantics = [], scalar_prefetch = 0 : i64, scratch_operands = 0 : i64, tpu.core_type = #tpu.core_type<tc>} {
    %0 = tpu.iota {dimensions = array<i32: 1>} : vector<1x16xi32>
    %c0 = arith.constant 0 : index
    %1 = memref.load %arg0[%c0] : memref<6xi32, #tpu.memory_space<smem>>
    %c1 = arith.constant 1 : index
    %2 = memref.load %arg0[%c1] : memref<6xi32, #tpu.memory_space<smem>>
    %c2 = arith.constant 2 : index
    %3 = memref.load %arg0[%c2] : memref<6xi32, #tpu.memory_space<smem>>
    %c0_i32 = arith.constant 0 : i32
    %4 = vector.broadcast %c0_i32 : i32 to vector<1x16xi32>
    %5 = arith.subi %0, %4 : vector<1x16xi32>
    %c0_i32_0 = arith.constant 0 : i32
    %6 = arith.addi %c0_i32_0, %1 : i32
    %7 = vector.broadcast %6 : i32 to vector<1x16xi32>
    %8 = arith.cmpi eq, %0, %7 : vector<1x16xi32>
    %9 = arith.extui %8 : vector<1x16xi1> to vector<1x16xi32>
    %10 = arith.sitofp %9 : vector<1x16xi32> to vector<1x16xf32>
    %c0_i32_1 = arith.constant 0 : i32
    %11 = arith.addi %c0_i32_1, %2 : i32
    %c1_i32 = arith.constant 1 : i32
    %12 = arith.subi %11, %c1_i32 : i32
    %13 = vector.broadcast %12 : i32 to vector<1x16xi32>
    %14 = arith.cmpi eq, %0, %13 : vector<1x16xi32>
    %15 = arith.extui %14 : vector<1x16xi1> to vector<1x16xi32>
    %16 = arith.sitofp %15 : vector<1x16xi32> to vector<1x16xf32>
    %c0_i32_2 = arith.constant 0 : i32
    %17 = vector.broadcast %c0_i32_2 : i32 to vector<1x16xi32>
    %18 = arith.cmpi slt, %5, %17 : vector<1x16xi32>
    %c8_i32 = arith.constant 8 : i32
    %19 = vector.broadcast %c8_i32 : i32 to vector<1x16xi32>
    %20 = arith.cmpi sge, %5, %19 : vector<1x16xi32>
    %21 = arith.ori %18, %20 : vector<1x16xi1>
    %22 = vector.broadcast %3 : i32 to vector<1x16xi32>
    %23 = arith.cmpi sge, %5, %22 : vector<1x16xi32>
    %24 = vector.broadcast %1 : i32 to vector<1x16xi32>
    %25 = arith.cmpi sge, %5, %24 : vector<1x16xi32>
    %26 = vector.broadcast %2 : i32 to vector<1x16xi32>
    %27 = arith.cmpi slt, %5, %26 : vector<1x16xi32>
    %28 = arith.andi %25, %27 : vector<1x16xi1>
    %29 = arith.ori %21, %23 : vector<1x16xi1>
    %30 = arith.ori %29, %28 : vector<1x16xi1>
    %cst = arith.constant -1.000000e+05 : f32
    %cst_3 = arith.constant 0.000000e+00 : f32
    %31 = vector.broadcast %cst : f32 to vector<1x16xf32>
    %32 = vector.broadcast %cst_3 : f32 to vector<1x16xf32>
    %33 = arith.select %30, %31, %32 : vector<1x16xi1>, vector<1x16xf32>
    %c3 = arith.constant 3 : index
    %34 = memref.load %arg0[%c3] : memref<6xi32, #tpu.memory_space<smem>>
    %c4 = arith.constant 4 : index
    %35 = memref.load %arg0[%c4] : memref<6xi32, #tpu.memory_space<smem>>
    %c5 = arith.constant 5 : index
    %36 = memref.load %arg0[%c5] : memref<6xi32, #tpu.memory_space<smem>>
    %c8_i32_4 = arith.constant 8 : i32
    %37 = vector.broadcast %c8_i32_4 : i32 to vector<1x16xi32>
    %38 = arith.subi %0, %37 : vector<1x16xi32>
    %c8_i32_5 = arith.constant 8 : i32
    %39 = arith.addi %c8_i32_5, %34 : i32
    %40 = vector.broadcast %39 : i32 to vector<1x16xi32>
    %41 = arith.cmpi eq, %0, %40 : vector<1x16xi32>
    %42 = arith.extui %41 : vector<1x16xi1> to vector<1x16xi32>
    %43 = arith.sitofp %42 : vector<1x16xi32> to vector<1x16xf32>
    %c8_i32_6 = arith.constant 8 : i32
    %44 = arith.addi %c8_i32_6, %35 : i32
    %c1_i32_7 = arith.constant 1 : i32
    %45 = arith.subi %44, %c1_i32_7 : i32
    %46 = vector.broadcast %45 : i32 to vector<1x16xi32>
    %47 = arith.cmpi eq, %0, %46 : vector<1x16xi32>
    %48 = arith.extui %47 : vector<1x16xi1> to vector<1x16xi32>
    %49 = arith.sitofp %48 : vector<1x16xi32> to vector<1x16xf32>
    %c0_i32_8 = arith.constant 0 : i32
    %50 = vector.broadcast %c0_i32_8 : i32 to vector<1x16xi32>
    %51 = arith.cmpi slt, %38, %50 : vector<1x16xi32>
    %c8_i32_9 = arith.constant 8 : i32
    %52 = vector.broadcast %c8_i32_9 : i32 to vector<1x16xi32>
    %53 = arith.cmpi sge, %38, %52 : vector<1x16xi32>
    %54 = arith.ori %51, %53 : vector<1x16xi1>
    %55 = vector.broadcast %36 : i32 to vector<1x16xi32>
    %56 = arith.cmpi sge, %38, %55 : vector<1x16xi32>
    %57 = vector.broadcast %34 : i32 to vector<1x16xi32>
    %58 = arith.cmpi sge, %38, %57 : vector<1x16xi32>
    %59 = vector.broadcast %35 : i32 to vector<1x16xi32>
    %60 = arith.cmpi slt, %38, %59 : vector<1x16xi32>
    %61 = arith.andi %58, %60 : vector<1x16xi1>
    %62 = arith.ori %54, %56 : vector<1x16xi1>
    %63 = arith.ori %62, %61 : vector<1x16xi1>
    %cst_10 = arith.constant -1.000000e+05 : f32
    %cst_11 = arith.constant 0.000000e+00 : f32
    %64 = vector.broadcast %cst_10 : f32 to vector<1x16xf32>
    %65 = vector.broadcast %cst_11 : f32 to vector<1x16xf32>
    %66 = arith.select %63, %64, %65 : vector<1x16xi1>, vector<1x16xf32>
    %67 = tpu.concatenate %10, %43, %16, %49 in 0 : vector<1x16xf32>, vector<1x16xf32>, vector<1x16xf32>, vector<1x16xf32> -> vector<4x16xf32>
    %68 = tpu.concatenate %33, %66 in 0 : vector<1x16xf32>, vector<1x16xf32> -> vector<2x16xf32>
    %c0_12 = arith.constant 0 : index
    %c0_13 = arith.constant 0 : index
    %69 = vector.load %arg1[%c0_12, %c0_13] : memref<16x128xf32, #tpu.memory_space<vmem>>, vector<16x128xf32>
    %cst_14 = arith.constant dense<0.000000e+00> : vector<4x128xf32>
    %70 = tpu.matmul %67, %69, %cst_14 {dimension_numbers = #tpu.dot_dimension_numbers<[1], [0], [0], [1], [0, 0, 1, 1], [], []>} : vector<4x16xf32>, vector<16x128xf32>, vector<4x128xf32> -> vector<4x128xf32>
    %71 = vector.extract_strided_slice %70 {offsets = [0, 0], sizes = [2, 32], strides = [1, 1]} : vector<4x128xf32> to vector<2x32xf32>
    %72 = vector.extract_strided_slice %70 {offsets = [2, 32], sizes = [2, 32], strides = [1, 1]} : vector<4x128xf32> to vector<2x32xf32>
    %73 = tpu.concatenate %71, %72 in 1 : vector<2x32xf32>, vector<2x32xf32> -> vector<2x64xf32>
    %74 = vector.extract_strided_slice %70 {offsets = [0, 64], sizes = [2, 32], strides = [1, 1]} : vector<4x128xf32> to vector<2x32xf32>
    %75 = vector.extract_strided_slice %70 {offsets = [2, 64], sizes = [2, 32], strides = [1, 1]} : vector<4x128xf32> to vector<2x32xf32>
    %76 = tpu.concatenate %74, %75 in 1 : vector<2x32xf32>, vector<2x32xf32> -> vector<2x64xf32>
    %c128 = arith.constant 128 : index
    %c0_15 = arith.constant 0 : index
    %77 = vector.load %arg2[%c128, %c0_15] : memref<136x128xf32, #tpu.memory_space<vmem>>, vector<2x128xf32>
    %78 = vector.extract_strided_slice %69 {offsets = [0, 0], sizes = [16, 64], strides = [1, 1]} : vector<16x128xf32> to vector<16x64xf32>
    %79 = tpu.concatenate %76, %73, %78 in 0 : vector<2x64xf32>, vector<2x64xf32>, vector<16x64xf32> -> vector<20x64xf32>
    %c0_16 = arith.constant 0 : index
    %c0_17 = arith.constant 0 : index
    %80 = vector.load %arg2[%c0_16, %c0_17] : memref<136x128xf32, #tpu.memory_space<vmem>>, vector<64x128xf32>
    %cst_18 = arith.constant dense<0.000000e+00> : vector<20x128xf32>
    %81 = tpu.matmul %79, %80, %cst_18 {dimension_numbers = #tpu.dot_dimension_numbers<[1], [0], [0], [1], [0, 0, 1, 1], [], []>} : vector<20x64xf32>, vector<64x128xf32>, vector<20x128xf32> -> vector<20x128xf32>
    %82 = vector.extract_strided_slice %77 {offsets = [0, 0], sizes = [1, 128], strides = [1, 1]} : vector<2x128xf32> to vector<1x128xf32>
    %83 = vector.broadcast %82 : vector<1x128xf32> to vector<20x128xf32>
    %84 = arith.addf %81, %83 : vector<20x128xf32>
    %85 = vector.extract_strided_slice %84 {offsets = [0, 0], sizes = [2, 32], strides = [1, 1]} : vector<20x128xf32> to vector<2x32xf32>
    %86 = vector.extract_strided_slice %84 {offsets = [2, 32], sizes = [2, 32], strides = [1, 1]} : vector<20x128xf32> to vector<2x32xf32>
    %87 = vector.extract_strided_slice %84 {offsets = [4, 64], sizes = [16, 32], strides = [1, 1]} : vector<20x128xf32> to vector<16x32xf32>
    %88 = vector.extract_strided_slice %84 {offsets = [4, 96], sizes = [16, 32], strides = [1, 1]} : vector<20x128xf32> to vector<16x32xf32>
    %cst_19 = arith.constant dense<0.000000e+00> : vector<2x16xf32>
    %89 = tpu.matmul %86, %87, %cst_19 {dimension_numbers = #tpu.dot_dimension_numbers<[1], [1], [0], [0], [0, 0, 1, 0], [], []>} : vector<2x32xf32>, vector<16x32xf32>, vector<2x16xf32> -> vector<2x16xf32>
    %cst_20 = arith.constant 0.176776692 : f32
    %90 = vector.broadcast %cst_20 : f32 to vector<2x16xf32>
    %91 = arith.mulf %89, %90 : vector<2x16xf32>
    %92 = arith.addf %91, %68 : vector<2x16xf32>
    %93 = math.exp %92 : vector<2x16xf32>
    %cst_21 = arith.constant dense<0.000000e+00> : vector<2xf32>
    %94 = vector.multi_reduction <add>, %93, %cst_21 [1] : vector<2x16xf32> to vector<2xf32>
    %95 = vector.shape_cast %94 : vector<2xf32> to vector<2x1xf32>
    %96 = tpu.reciprocal %95 {approx = true} : vector<2x1xf32> -> vector<2x1xf32>
    %97 = vector.broadcast %96 : vector<2x1xf32> to vector<2x16xf32>
    %98 = arith.mulf %93, %97 : vector<2x16xf32>
    %cst_22 = arith.constant dense<0.000000e+00> : vector<2x32xf32>
    %99 = tpu.matmul %98, %88, %cst_22 {dimension_numbers = #tpu.dot_dimension_numbers<[1], [0], [0], [1], [0, 0, 1, 1], [], []>} : vector<2x16xf32>, vector<16x32xf32>, vector<2x32xf32> -> vector<2x32xf32>
    %c64 = arith.constant 64 : index
    %c0_23 = arith.constant 0 : index
    %100 = vector.load %arg2[%c64, %c0_23] : memref<136x128xf32, #tpu.memory_space<vmem>>, vector<64x128xf32>
    %cst_24 = arith.constant 0.000000e+00 : f32
    %101 = vector.broadcast %cst_24 : f32 to vector<2x32xf32>
    %102 = arith.maximumf %85, %101 : vector<2x32xf32>
    %cst_25 = arith.constant 0.000000e+00 : f32
    %103 = vector.broadcast %cst_25 : f32 to vector<2x32xf32>
    %104 = arith.maximumf %99, %103 : vector<2x32xf32>
    %105 = tpu.concatenate %102, %104 in 1 : vector<2x32xf32>, vector<2x32xf32> -> vector<2x64xf32>
    %106 = vector.extract_strided_slice %100 {offsets = [0, 0], sizes = [64, 32], strides = [1, 1]} : vector<64x128xf32> to vector<64x32xf32>
    %cst_26 = arith.constant dense<0.000000e+00> : vector<2x32xf32>
    %107 = tpu.matmul %105, %106, %cst_26 {dimension_numbers = #tpu.dot_dimension_numbers<[1], [0], [0], [1], [0, 0, 1, 1], [], []>} : vector<2x64xf32>, vector<64x32xf32>, vector<2x32xf32> -> vector<2x32xf32>
    %108 = vector.extract_strided_slice %77 {offsets = [1, 0], sizes = [1, 32], strides = [1, 1]} : vector<2x128xf32> to vector<1x32xf32>
    %109 = vector.broadcast %108 : vector<1x32xf32> to vector<2x32xf32>
    %110 = arith.addf %107, %109 : vector<2x32xf32>
    %cst_27 = arith.constant 0.000000e+00 : f32
    %111 = vector.broadcast %cst_27 : f32 to vector<2x32xf32>
    %112 = arith.maximumf %110, %111 : vector<2x32xf32>
    %113 = vector.extract_strided_slice %100 {offsets = [32, 72], sizes = [32, 8], strides = [1, 1]} : vector<64x128xf32> to vector<32x8xf32>
    %cst_28 = arith.constant dense<0.000000e+00> : vector<2x8xf32>
    %114 = tpu.matmul %112, %113, %cst_28 {dimension_numbers = #tpu.dot_dimension_numbers<[1], [0], [0], [1], [0, 0, 1, 1], [], []>} : vector<2x32xf32>, vector<32x8xf32>, vector<2x8xf32> -> vector<2x8xf32>
    %115 = vector.extract_strided_slice %77 {offsets = [1, 32], sizes = [1, 8], strides = [1, 1]} : vector<2x128xf32> to vector<1x8xf32>
    %116 = vector.broadcast %115 : vector<1x8xf32> to vector<2x8xf32>
    %117 = arith.addf %114, %116 : vector<2x8xf32>
    %cst_29 = arith.constant 1.000000e+00 : f32
    %118 = vector.broadcast %cst_29 : f32 to vector<2x1xf32>
    %119 = tpu.concatenate %99, %118 in 1 : vector<2x32xf32>, vector<2x1xf32> -> vector<2x33xf32>
    %120 = tpu.concatenate %85, %118 in 1 : vector<2x32xf32>, vector<2x1xf32> -> vector<2x33xf32>
    %121 = vector.extract_strided_slice %100 {offsets = [0, 32], sizes = [33, 33], strides = [1, 1]} : vector<64x128xf32> to vector<33x33xf32>
    %cst_30 = arith.constant dense<0.000000e+00> : vector<2x33xf32>
    %122 = tpu.matmul %119, %121, %cst_30 {dimension_numbers = #tpu.dot_dimension_numbers<[1], [0], [0], [1], [0, 0, 1, 1], [], []>} : vector<2x33xf32>, vector<33x33xf32>, vector<2x33xf32> -> vector<2x33xf32>
    %123 = arith.mulf %122, %120 : vector<2x33xf32>
    %cst_31 = arith.constant dense<0.000000e+00> : vector<2xf32>
    %124 = vector.multi_reduction <add>, %123, %cst_31 [1] : vector<2x33xf32> to vector<2xf32>
    %125 = vector.shape_cast %124 : vector<2xf32> to vector<2x1xf32>
    %126 = arith.negf %125 : vector<2x1xf32>
    %127 = math.exp %126 : vector<2x1xf32>
    %cst_32 = arith.constant 1.000000e+00 : f32
    %128 = vector.broadcast %cst_32 : f32 to vector<2x1xf32>
    %129 = arith.addf %128, %127 : vector<2x1xf32>
    %130 = arith.divf %128, %129 : vector<2x1xf32>
    %cst_33 = arith.constant 1.000000e+00 : f32
    %131 = vector.broadcast %cst_33 : f32 to vector<2x1xf32>
    %132 = arith.subf %131, %130 : vector<2x1xf32>
    %133 = tpu.concatenate %132, %130 in 1 : vector<2x1xf32>, vector<2x1xf32> -> vector<2x2xf32>
    %cst_34 = arith.constant 1.000000e+00 : f32
    %134 = vector.broadcast %cst_34 : f32 to vector<2x1xf32>
    %135 = arith.subf %134, %130 : vector<2x1xf32>
    %136 = vector.broadcast %135 : vector<2x1xf32> to vector<2x32xf32>
    %137 = arith.mulf %99, %136 : vector<2x32xf32>
    %138 = vector.broadcast %130 : vector<2x1xf32> to vector<2x32xf32>
    %139 = arith.mulf %85, %138 : vector<2x32xf32>
    %140 = arith.addf %137, %139 : vector<2x32xf32>
    %141 = vector.extract_strided_slice %100 {offsets = [0, 72], sizes = [32, 16], strides = [1, 1]} : vector<64x128xf32> to vector<32x16xf32>
    %cst_35 = arith.constant dense<0.000000e+00> : vector<2x16xf32>
    %142 = tpu.matmul %140, %141, %cst_35 {dimension_numbers = #tpu.dot_dimension_numbers<[1], [0], [0], [1], [0, 0, 1, 1], [], []>} : vector<2x32xf32>, vector<32x16xf32>, vector<2x16xf32> -> vector<2x16xf32>
    %143 = vector.extract_strided_slice %77 {offsets = [1, 40], sizes = [1, 16], strides = [1, 1]} : vector<2x128xf32> to vector<1x16xf32>
    %144 = vector.broadcast %143 : vector<1x16xf32> to vector<2x16xf32>
    %145 = arith.addf %142, %144 : vector<2x16xf32>
    %cst_36 = arith.constant 0.000000e+00 : f32
    %146 = vector.broadcast %cst_36 : f32 to vector<2x16xf32>
    %147 = arith.maximumf %145, %146 : vector<2x16xf32>
    %148 = vector.extract_strided_slice %100 {offsets = [32, 88], sizes = [16, 4], strides = [1, 1]} : vector<64x128xf32> to vector<16x4xf32>
    %cst_37 = arith.constant dense<0.000000e+00> : vector<2x4xf32>
    %149 = tpu.matmul %147, %148, %cst_37 {dimension_numbers = #tpu.dot_dimension_numbers<[1], [0], [0], [1], [0, 0, 1, 1], [], []>} : vector<2x16xf32>, vector<16x4xf32>, vector<2x4xf32> -> vector<2x4xf32>
    %150 = vector.extract_strided_slice %77 {offsets = [1, 56], sizes = [1, 4], strides = [1, 1]} : vector<2x128xf32> to vector<1x4xf32>
    %151 = vector.broadcast %150 : vector<1x4xf32> to vector<2x4xf32>
    %152 = arith.addf %149, %151 : vector<2x4xf32>
    %cst_38 = arith.constant 0.000000e+00 : f32
    %153 = vector.broadcast %cst_38 : f32 to vector<2x114xf32>
    %154 = tpu.concatenate %152, %117, %133, %153 in 1 : vector<2x4xf32>, vector<2x8xf32>, vector<2x2xf32>, vector<2x114xf32> -> vector<2x128xf32>
    %cst_39 = arith.constant 0.000000e+00 : f32
    %155 = vector.broadcast %cst_39 : f32 to vector<6x128xf32>
    %156 = tpu.concatenate %154, %155 in 0 : vector<2x128xf32>, vector<6x128xf32> -> vector<8x128xf32>
    %c0_40 = arith.constant 0 : index
    %c0_41 = arith.constant 0 : index
    %157 = vector.load %arg3[%c0_40, %c0_41] : memref<8x128xf32, #tpu.memory_space<vmem>>, vector<8x128xf32>
    tpu.vector_store %arg3[%c0_40, %c0_41], %156 {strides = array<i32>} : memref<8x128xf32, #tpu.memory_space<vmem>>, vector<8x128xf32>,
    return
  }
}

</mosaic_0001>

<llo_original>
// kernel: tpu_custom_call.1
$region0: #{tpu_custom_call.1}
  #allocation0 [shape = 'u32[]', space=smem, size = 0x4, offset = 0x4, fixed_abs, tag = 'smem constant byte address 0x4 - core index']
  #allocation1 [shape = 'u32[144,128]{1,0:T(1,128)}', space=vmem, size = 0x12000, scoped, tag = 'internal scratch']
  %s0 = inlined_call_operand.hbm [shape: s32[6], index: 0, kind: input, shape index: {}]
  %s1 = inlined_call_operand.hbm [shape: f32[16,128], index: 1, kind: input, shape index: {}]
  %s2 = inlined_call_operand.hbm [shape: f32[136,128], index: 2, kind: input, shape index: {}]
  %s3 = inlined_call_operand.hbm [shape: f32[8,128], index: 3, kind: output, shape index: {}]
  %s4 = sld [smem:[#allocation0]]
  $region34: #{tpu_custom_call.1} parent=0
    _
  %s6 = ssub.s32 1, %s4
  %s7 = scalar_select 0, %s6, %s4
  $region1: #{tpu_custom_call.1} parent=0
    #allocation2 [shape = 'u8[512]{0}', space=smem, size = 0x200, scoped, tag = 'input window, operand 0, single buffered']
    #allocation3 [shape = 's32[1]{0}', space=sflag, size = 0x4, scoped, tag = 'scoped memory for tpu_custom_call.1']
    #allocation4 [shape = 's32[1]{0}', space=sflag, size = 0x4, scoped, tag = 'scoped memory for tpu_custom_call.1']
    #allocation5 [shape = 's32[1]{0}', space=sflag, size = 0x4, scoped, tag = 'scoped memory for tpu_custom_call.1']
    #allocation6 [shape = 'u8[8192]{0}', space=vmem, size = 0x2000, scoped, tag = 'input window, operand 1, single buffered']
    #allocation7 [shape = 'u8[69632]{0}', space=vmem, size = 0x11000, scoped, tag = 'input window, operand 2, single buffered']
    #allocation8 [shape = 's32[1]{0}', space=sflag, size = 0x4, scoped, tag = 'scoped memory for tpu_custom_call.1']
    #allocation9 [shape = 'u8[4096]{0}', space=vmem, size = 0x1000, scoped, tag = 'output window, operand 0, single buffered']
    %8 = vsyncpa [#allocation5], 0
    %9 = vsyncpa [#allocation3], 0
    %10 = vsyncpa [#allocation8], 0
    %11 = vsyncpa [#allocation4], 0
    // Predicated region
    $region2: #{tpu_custom_call.1} parent=1 // pred_check
      _
    $region3: #{tpu_custom_call.1} parent=1 // pred_check_branch
      %13 = sbr.rel (0) target = $region5
    $region4: #{tpu_custom_call.1} parent=1 // pred_region
      %s15 = ssub.s32 16, 16
      %16 = vsyncadd [#allocation5], %s15
      %19 = dma.hbm_to_smem %s0, 16, [#allocation2], [#allocation5]
    $region5: #{tpu_custom_call.1} parent=1 // pred_fallthru
      _
    // Predicated region
    $region6: #{tpu_custom_call.1} parent=1 // pred_check
      _
    $region7: #{tpu_custom_call.1} parent=1 // pred_check_branch
      %21 = sbr.rel (0) target = $region9
    $region8: #{tpu_custom_call.1} parent=1 // pred_region
      %s23 = ssub.s32 256, 256
      %24 = vsyncadd [#allocation3], %s23
      %s25 = sshll.u32 [#allocation6], 4
      %s26 = int_to_ptr.vmem [resolvable:$true] %s25
      %31 = dma.hbm_to_vmem [thread:$0]  %s1, 256, %s26, [#allocation3], 128, 128, 8
    $region9: #{tpu_custom_call.1} parent=1 // pred_fallthru
      _
    // Predicated region
    $region10: #{tpu_custom_call.1} parent=1 // pred_check
      _
    $region11: #{tpu_custom_call.1} parent=1 // pred_check_branch
      %33 = sbr.rel (0) target = $region13
    $region12: #{tpu_custom_call.1} parent=1 // pred_region
      %s35 = ssub.s32 2176, 2176
      %36 = vsyncadd [#allocation8], %s35
      %s37 = sshll.u32 [#allocation7], 4
      %s38 = int_to_ptr.vmem [resolvable:$true] %s37
      %43 = dma.hbm_to_vmem [thread:$0]  %s2, 2176, %s38, [#allocation8], 128, 128, 8
    $region13: #{tpu_custom_call.1} parent=1 // pred_fallthru
      _
    // Predicated region
    $region14: #{tpu_custom_call.1} parent=1 // pred_check
      _
    $region15: #{tpu_custom_call.1} parent=1 // pred_check_branch
      %45 = sbr.rel (0) target = $region17
    $region16: #{tpu_custom_call.1} parent=1 // pred_region
      %46 = dma.done [#allocation5], 16
    $region17: #{tpu_custom_call.1} parent=1 // pred_fallthru
      _
    // Predicated region
    $region18: #{tpu_custom_call.1} parent=1 // pred_check
      _
    $region19: #{tpu_custom_call.1} parent=1 // pred_check_branch
      %48 = sbr.rel (0) target = $region21
    $region20: #{tpu_custom_call.1} parent=1 // pred_region
      %49 = dma.done [#allocation3], 256
    $region21: #{tpu_custom_call.1} parent=1 // pred_fallthru
      _
    // Predicated region
    $region22: #{tpu_custom_call.1} parent=1 // pred_check
      _
    $region23: #{tpu_custom_call.1} parent=1 // pred_check_branch
      %51 = sbr.rel (0) target = $region25
    $region24: #{tpu_custom_call.1} parent=1 // pred_region
      %52 = dma.done [#allocation8], 2176
    $region25: #{tpu_custom_call.1} parent=1 // pred_fallthru
      _
    %53 = sfence
    %v54 = vlaneseq
    %v55 = vand.u32 %v54, 127
    %s56 = sld [smem:[#allocation2]]
    %s57 = sld [smem:[#allocation2 + $0x1]]
    %s58 = sld [smem:[#allocation2 + $0x2]]
    %v59 = vstv %s56
    %vm60 = vcmp.eq.s32.totalorder %v55, %v59
    %v61 = vsel %vm60, 1, 0
    %v62 = vcvt.s32.f32 %v61
    %s63 = ssub.s32 %s57, 1
    %v64 = vstv %s63
    %vm65 = vcmp.eq.s32.totalorder %v55, %v64
    %v66 = vsel %vm65, 1, 0
    %v67 = vcvt.s32.f32 %v66
    %vm68 = vcmp.lt.s32.totalorder %v55, 0
    %vm69 = vcmp.ge.s32.totalorder %v55, 8
    %vm70 = vmor %vm68, %vm69
    %v71 = vstv %s58
    %vm72 = vcmp.ge.s32.totalorder %v55, %v71
    %vm73 = vcmp.ge.s32.totalorder %v55, %v59
    %v74 = vstv %s57
    %vm75 = vcmp.lt.s32.totalorder %v55, %v74
    %vm76 = vmand %vm73, %vm75
    %vm77 = vmor %vm70, %vm72
    %vm78 = vmor %vm77, %vm76
    %v79 = vsel %vm78, -100000.0, 0.0
    %s80 = sld [smem:[#allocation2 + $0x3]]
    %s81 = sld [smem:[#allocation2 + $0x4]]
    %s82 = sld [smem:[#allocation2 + $0x5]]
    %v83 = vsub.s32 %v55, 8
    %s84 = sadd.s32 %s80, 8
    %v85 = vstv %s84
    %vm86 = vcmp.eq.s32.totalorder %v55, %v85
    %v87 = vsel %vm86, 1, 0
    %v88 = vcvt.s32.f32 %v87
    %s89 = sadd.s32 %s81, 7
    %v90 = vstv %s89
    %vm91 = vcmp.eq.s32.totalorder %v55, %v90
    %v92 = vsel %vm91, 1, 0
    %v93 = vcvt.s32.f32 %v92
    %vm94 = vcmp.lt.s32.totalorder %v83, 0
    %vm95 = vcmp.ge.s32.totalorder %v83, 8
    %vm96 = vmor %vm94, %vm95
    %v97 = vstv %s82
    %vm98 = vcmp.ge.s32.totalorder %v83, %v97
    %v99 = vstv %s80
    %vm100 = vcmp.ge.s32.totalorder %v83, %v99
    %v101 = vstv %s81
    %vm102 = vcmp.lt.s32.totalorder %v83, %v101
    %vm103 = vmand %vm100, %vm102
    %vm104 = vmor %vm96, %vm98
    %vm105 = vmor %vm104, %vm103
    %v106 = vsel %vm105, -100000.0, 0.0
    %vm107 = vcmask 1040384
    %v108 = vsel %vm107, %v62, %v88
    %vm109 = vcmask 1041408
    %v110 = vsel %vm109, %v108, %v67
    %vm111 = vcmask 1042432
    %v112 = vsel %vm111, %v110, %v93
    %v113 = vsel %vm107, %v79, %v106
    %v114 = vld [vmem:[#allocation6] sm:$0xff]
    %v115 = vld [vmem:[#allocation6 + $0x8] sm:$0xff]
    %vm116 = vcmask 130048
    %v118 = vsel %vm116, %v112, 0
    %120 = vmatprep.subr.mxu0 0.0
    %121 = vmatpush1.msra.mxu0 %v114
    %122 = vmatprep.subr.mxu0 0.0
    %123 = vmatpush1.msra.mxu0 %v115
    %124 = vmatprep.subr.mxu0 0.0
    %125 = vmatpush1.msra.mxu0 0.0
    %126 = vmatprep.subr.mxu0 0.0
    %127 = vmatpush1.msra.mxu0 0.0
    %128 = vmatprep.subr.mxu0 0.0
    %129 = vmatpush1.msra.mxu0 0.0
    %130 = vmatprep.subr.mxu0 0.0
    %131 = vmatpush1.msra.mxu0 0.0
    %132 = vmatprep.subr.mxu0 0.0
    %133 = vmatpush1.msra.mxu0 0.0
    %134 = vmatprep.subr.mxu0 0.0
    %135 = vmatpush1.msra.mxu0 0.0
    %136 = vmatprep.subr.mxu0 0.0
    %137 = vmatpush1.msra.mxu0 0.0
    %138 = vmatprep.subr.mxu0 0.0
    %139 = vmatpush1.msra.mxu0 0.0
    %140 = vmatprep.subr.mxu0 0.0
    %141 = vmatpush1.msra.mxu0 0.0
    %142 = vmatprep.subr.mxu0 0.0
    %143 = vmatpush1.msra.mxu0 0.0
    %144 = vmatprep.subr.mxu0 0.0
    %145 = vmatpush1.msra.mxu0 0.0
    %146 = vmatprep.subr.mxu0 0.0
    %147 = vmatpush1.msra.mxu0 0.0
    %148 = vmatprep.subr.mxu0 0.0
    %149 = vmatpush1.msra.mxu0 0.0
    %150 = vmatprep.subr.mxu0 0.0
    %151 = vmatpush1.msra.mxu0 0.0
    %152 = vmatprep.subr.mxu0 0.0
    %153 = vmatpush1.msra.mxu0 0.0
    %154 = vmatprep.subr.mxu0 0.0
    %155 = vmatpush1.msra.mxu0 0.0
    %156 = vmatprep.subr.mxu0 0.0
    %157 = vmatpush1.msra.mxu0 0.0
    %158 = vmatprep.subr.mxu0 0.0
    %159 = vmatpush1.msra.mxu0 0.0
    %160 = vmatprep.subr.mxu0 0.0
    %161 = vmatpush1.msra.mxu0 0.0
    %162 = vmatprep.subr.mxu0 0.0
    %163 = vmatpush1.msra.mxu0 0.0
    %164 = vmatprep.subr.mxu0 0.0
    %165 = vmatpush1.msra.mxu0 0.0
    %166 = vmatprep.subr.mxu0 0.0
    %167 = vmatpush1.msra.mxu0 0.0
    %168 = vmatprep.subr.mxu0 0.0
    %169 = vmatpush1.msra.mxu0 0.0
    %170 = vmatprep.subr.mxu0 0.0
    %171 = vmatpush1.msra.mxu0 0.0
    %172 = vmatprep.subr.mxu0 0.0
    %173 = vmatpush1.msra.mxu0 0.0
    %174 = vmatprep.subr.mxu0 0.0
    %175 = vmatpush1.msra.mxu0 0.0
    %176 = vmatprep.subr.mxu0 0.0
    %177 = vmatpush1.msra.mxu0 0.0
    %178 = vmatprep.subr.mxu0 0.0
    %179 = vmatpush1.msra.mxu0 0.0
    %180 = vmatprep.subr.mxu0 0.0
    %181 = vmatpush1.msra.mxu0 0.0
    %182 = vmatprep.subr.mxu0 0.0
    %183 = vmatpush1.msra.mxu0 0.0
    %184 = vmatprep.mubr.f32.mxu0 0.0
    %185 = vmatmul.mubr.f32.gmra.mrb[0].mxu0 %v118
    %v186 = vpop.f32.mrb[0].mxu0
    %v187 = vadd.f32 0.0, %v186
    %v188 = vpop.f32.mrb[0].mxu0
    %189 = vdwg.mxu0
    %v191 = vrot.slane %v187, 2
    %vm193 = vcmask 261120
    %v194 = vsel %vm193, %v187, %v191
    %195 = vrot.lane.b32.xlu0 %v187, 64
    %v196 = vpop.permute.xlu0 %195
    %198 = vrot.lane.b32.xlu0 %v191, 96
    %v199 = vpop.permute.xlu0 %198
    %v201 = vsel %vm193, %v196, %v199
    %v202 = vld [vmem:[#allocation7 + $0x80] sm:$0x3]
    %v204 = vrot.slane %v194, 6
    %vm208 = vcmask 1043456
    %v209 = vrot.slane %v114, 4
    %v210 = vrot.slane %v115, 4
    %v211 = vsel %vm208, %v209, %v210
    %v213 = vsel %vm109, %v201, %v204
    %v214 = vsel %vm208, %v213, %v209
    %v215 = vld [vmem:[#allocation7] sm:$0xff]
    %v216 = vld [vmem:[#allocation7 + $0x8] sm:$0xff]
    %v217 = vld [vmem:[#allocation7 + $0x10] sm:$0xff]
    %v218 = vld [vmem:[#allocation7 + $0x18] sm:$0xff]
    %v219 = vld [vmem:[#allocation7 + $0x20] sm:$0xff]
    %v220 = vld [vmem:[#allocation7 + $0x28] sm:$0xff]
    %v221 = vld [vmem:[#allocation7 + $0x30] sm:$0xff]
    %v222 = vld [vmem:[#allocation7 + $0x38] sm:$0xff]
    %v223 = vlaneseq
    %v224 = vshrl.u32 %v223, 7
    %v225 = vsub.s32 0, %v224
    %v226 = vrot.slane %v202, %v225
    %vm227 = vcmask 523264
    %v229 = vsel %vm227, %v214, 0
    %v231 = vsel %vm227, %v211, 0
    %v233 = vsel %vm227, %v210, 0
    %235 = vmatprep.subr.mxu0 0.0
    %236 = vmatpush1.msra.mxu0 %v215
    %237 = vmatprep.subr.mxu0 0.0
    %238 = vmatpush1.msra.mxu0 %v216
    %239 = vmatprep.subr.mxu0 0.0
    %240 = vmatpush1.msra.mxu0 %v217
    %241 = vmatprep.subr.mxu0 0.0
    %242 = vmatpush1.msra.mxu0 %v218
    %243 = vmatprep.subr.mxu0 0.0
    %244 = vmatpush1.msra.mxu0 %v219
    %245 = vmatprep.subr.mxu0 0.0
    %246 = vmatpush1.msra.mxu0 %v220
    %247 = vmatprep.subr.mxu0 0.0
    %248 = vmatpush1.msra.mxu0 %v221
    %249 = vmatprep.subr.mxu0 0.0
    %250 = vmatpush1.msra.mxu0 %v222
    %251 = vmatprep.subr.mxu0 0.0
    %252 = vmatpush1.msra.mxu0 0.0
    %253 = vmatprep.subr.mxu0 0.0
    %254 = vmatpush1.msra.mxu0 0.0
    %255 = vmatprep.subr.mxu0 0.0
    %256 = vmatpush1.msra.mxu0 0.0
    %257 = vmatprep.subr.mxu0 0.0
    %258 = vmatpush1.msra.mxu0 0.0
    %259 = vmatprep.subr.mxu0 0.0
    %260 = vmatpush1.msra.mxu0 0.0
    %261 = vmatprep.subr.mxu0 0.0
    %262 = vmatpush1.msra.mxu0 0.0
    %263 = vmatprep.subr.mxu0 0.0
    %264 = vmatpush1.msra.mxu0 0.0
    %265 = vmatprep.subr.mxu0 0.0
    %266 = vmatpush1.msra.mxu0 0.0
    %267 = vmatprep.subr.mxu0 0.0
    %268 = vmatpush1.msra.mxu0 0.0
    %269 = vmatprep.subr.mxu0 0.0
    %270 = vmatpush1.msra.mxu0 0.0
    %271 = vmatprep.subr.mxu0 0.0
    %272 = vmatpush1.msra.mxu0 0.0
    %273 = vmatprep.subr.mxu0 0.0
    %274 = vmatpush1.msra.mxu0 0.0
    %275 = vmatprep.subr.mxu0 0.0
    %276 = vmatpush1.msra.mxu0 0.0
    %277 = vmatprep.subr.mxu0 0.0
    %278 = vmatpush1.msra.mxu0 0.0
    %279 = vmatprep.subr.mxu0 0.0
    %280 = vmatpush1.msra.mxu0 0.0
    %281 = vmatprep.subr.mxu0 0.0
    %282 = vmatpush1.msra.mxu0 0.0
    %283 = vmatprep.subr.mxu0 0.0
    %284 = vmatpush1.msra.mxu0 0.0
    %285 = vmatprep.subr.mxu0 0.0
    %286 = vmatpush1.msra.mxu0 0.0
    %287 = vmatprep.subr.mxu0 0.0
    %288 = vmatpush1.msra.mxu0 0.0
    %289 = vmatprep.subr.mxu0 0.0
    %290 = vmatpush1.msra.mxu0 0.0
    %291 = vmatprep.subr.mxu0 0.0
    %292 = vmatpush1.msra.mxu0 0.0
    %293 = vmatprep.subr.mxu0 0.0
    %294 = vmatpush1.msra.mxu0 0.0
    %295 = vmatprep.subr.mxu0 0.0
    %296 = vmatpush1.msra.mxu0 0.0
    %297 = vmatprep.subr.mxu0 0.0
    %298 = vmatpush1.msra.mxu0 0.0
    %299 = vmatprep.mubr.f32.mxu0 0.0
    %300 = vmatmul.mubr.f32.gmra.mrb[0].mxu0 %v229
    %v301 = vpop.f32.mrb[0].mxu0
    %v302 = vadd.f32 %v226, %v301
    %v303 = vpop.f32.mrb[0].mxu0
    %304 = vmatprep.mubr.f32.mxu0 0.0
    %305 = vmatmul.mubr.f32.gmra.mrb[0].mxu0 %v231
    %v306 = vpop.f32.mrb[0].mxu0
    %v307 = vadd.f32 %v226, %v306
    %v308 = vpop.f32.mrb[0].mxu0
    %309 = vmatprep.mubr.f32.mxu0 0.0
    %310 = vmatmul.mubr.f32.gmra.mrb[0].mxu0 %v233
    %v311 = vpop.f32.mrb[0].mxu0
    %v312 = vadd.f32 %v226, %v311
    %v313 = vpop.f32.mrb[0].mxu0
    %314 = vdwg.mxu0
    %v316 = vrot.slane %v302, 2
    %317 = vrot.lane.b32.xlu0 %v316, 96
    %v318 = vpop.permute.xlu0 %317
    %v321 = vrot.slane %v302, 4
    %v322 = vrot.slane %v307, 4
    %v323 = vsel %vm208, %v321, %v322
    %v324 = vrot.slane %v312, 4
    %v325 = vsel %vm208, %v322, %v324
    %326 = vrot.lane.b32.xlu0 %v323, 64
    %v327 = vpop.permute.xlu0 %326
    %328 = vrot.lane.b32.xlu0 %v325, 64
    %v329 = vpop.permute.xlu0 %328
    %v330 = vsel %vm193, %v318, 0
    %v332 = vsel %vm193, %v327, 0
    %v334 = vsel %vm193, %v329, 0
    %336 = vmatprep.subr.mxu0 0.0
    %337 = vmatpush1.xpose.msra.mxu0 %v332
    %338 = vmatprep.subr.mxu0 0.0
    %339 = vmatpush1.xpose.msra.mxu0 %v334
    %340 = vmatprep.subr.mxu0 0.0
    %341 = vmatpush1.xpose.msra.mxu0 0.0
    %342 = vmatprep.subr.mxu0 0.0
    %343 = vmatpush1.xpose.msra.mxu0 0.0
    %344 = vmatprep.subr.mxu0 0.0
    %345 = vmatpush1.xpose.msra.mxu0 0.0
    %346 = vmatprep.subr.mxu0 0.0
    %347 = vmatpush1.xpose.msra.mxu0 0.0
    %348 = vmatprep.subr.mxu0 0.0
    %349 = vmatpush1.xpose.msra.mxu0 0.0
    %350 = vmatprep.subr.mxu0 0.0
    %351 = vmatpush1.xpose.msra.mxu0 0.0
    %352 = vmatprep.subr.mxu0 0.0
    %353 = vmatpush1.xpose.msra.mxu0 0.0
    %354 = vmatprep.subr.mxu0 0.0
    %355 = vmatpush1.xpose.msra.mxu0 0.0
    %356 = vmatprep.subr.mxu0 0.0
    %357 = vmatpush1.xpose.msra.mxu0 0.0
    %358 = vmatprep.subr.mxu0 0.0
    %359 = vmatpush1.xpose.msra.mxu0 0.0
    %360 = vmatprep.subr.mxu0 0.0
    %361 = vmatpush1.xpose.msra.mxu0 0.0
    %362 = vmatprep.subr.mxu0 0.0
    %363 = vmatpush1.xpose.msra.mxu0 0.0
    %364 = vmatprep.subr.mxu0 0.0
    %365 = vmatpush1.xpose.msra.mxu0 0.0
    %366 = vmatprep.subr.mxu0 0.0
    %367 = vmatpush1.xpose.msra.mxu0 0.0
    %368 = vmatprep.subr.mxu0 0.0
    %369 = vmatpush1.xpose.msra.mxu0 0.0
    %370 = vmatprep.subr.mxu0 0.0
    %371 = vmatpush1.xpose.msra.mxu0 0.0
    %372 = vmatprep.subr.mxu0 0.0
    %373 = vmatpush1.xpose.msra.mxu0 0.0
    %374 = vmatprep.subr.mxu0 0.0
    %375 = vmatpush1.xpose.msra.mxu0 0.0
    %376 = vmatprep.subr.mxu0 0.0
    %377 = vmatpush1.xpose.msra.mxu0 0.0
    %378 = vmatprep.subr.mxu0 0.0
    %379 = vmatpush1.xpose.msra.mxu0 0.0
    %380 = vmatprep.subr.mxu0 0.0
    %381 = vmatpush1.xpose.msra.mxu0 0.0
    %382 = vmatprep.subr.mxu0 0.0
    %383 = vmatpush1.xpose.msra.mxu0 0.0
    %384 = vmatprep.subr.mxu0 0.0
    %385 = vmatpush1.xpose.msra.mxu0 0.0
    %386 = vmatprep.subr.mxu0 0.0
    %387 = vmatpush1.xpose.msra.mxu0 0.0
    %388 = vmatprep.subr.mxu0 0.0
    %389 = vmatpush1.xpose.msra.mxu0 0.0
    %390 = vmatprep.subr.mxu0 0.0
    %391 = vmatpush1.xpose.msra.mxu0 0.0
    %392 = vmatprep.subr.mxu0 0.0
    %393 = vmatpush1.xpose.msra.mxu0 0.0
    %394 = vmatprep.subr.mxu0 0.0
    %395 = vmatpush1.xpose.msra.mxu0 0.0
    %396 = vmatprep.subr.mxu0 0.0
    %397 = vmatpush1.xpose.msra.mxu0 0.0
    %398 = vmatprep.subr.mxu0 0.0
    %399 = vmatpush1.xpose.msra.mxu0 0.0
    %400 = vmatprep.mubr.f32.mxu0 0.0
    %401 = vmatmul.mubr.f32.gmra.mrb[0].mxu0 %v330
    %v402 = vpop.f32.mrb[0].mxu0
    %v403 = vadd.f32 0.0, %v402
    %v404 = vpop.f32.mrb[0].mxu0
    %405 = vdwg.mxu0
    %v406 = vmul.f32 %v403, 0.17677669
    %v407 = vadd.f32 %v406, %v113
    %v408 = vmul.f32 %v407, 1.442695
    %v409 = vpow.pop %v408
    %vm410 = vcmask 123904
    %v411 = vsel %vm410, %v409, 0.0
    %412 = vadd.xlane.f32.xlu0 %v411
    %v413 = vpop.xlane.xlu0 %412
    %v414 = vrcp.pop %v413
    %v415 = vmul.f32 %v409, %v414
    %416 = vrot.lane.b32.xlu0 %v323, 32
    %v417 = vpop.permute.xlu0 %416
    %418 = vrot.lane.b32.xlu0 %v325, 32
    %v419 = vpop.permute.xlu0 %418
    %v423 = vsel %vm116, %v415, 0
    %425 = vmatprep.subr.mxu0 0.0
    %426 = vmatpush1.msra.mxu0 %v417
    %427 = vmatprep.subr.mxu0 0.0
    %428 = vmatpush1.msra.mxu0 %v419
    %429 = vmatprep.subr.mxu0 0.0
    %430 = vmatpush1.msra.mxu0 0.0
    %431 = vmatprep.subr.mxu0 0.0
    %432 = vmatpush1.msra.mxu0 0.0
    %433 = vmatprep.subr.mxu0 0.0
    %434 = vmatpush1.msra.mxu0 0.0
    %435 = vmatprep.subr.mxu0 0.0
    %436 = vmatpush1.msra.mxu0 0.0
    %437 = vmatprep.subr.mxu0 0.0
    %438 = vmatpush1.msra.mxu0 0.0
    %439 = vmatprep.subr.mxu0 0.0
    %440 = vmatpush1.msra.mxu0 0.0
    %441 = vmatprep.subr.mxu0 0.0
    %442 = vmatpush1.msra.mxu0 0.0
    %443 = vmatprep.subr.mxu0 0.0
    %444 = vmatpush1.msra.mxu0 0.0
    %445 = vmatprep.subr.mxu0 0.0
    %446 = vmatpush1.msra.mxu0 0.0
    %447 = vmatprep.subr.mxu0 0.0
    %448 = vmatpush1.msra.mxu0 0.0
    %449 = vmatprep.subr.mxu0 0.0
    %450 = vmatpush1.msra.mxu0 0.0
    %451 = vmatprep.subr.mxu0 0.0
    %452 = vmatpush1.msra.mxu0 0.0
    %453 = vmatprep.subr.mxu0 0.0
    %454 = vmatpush1.msra.mxu0 0.0
    %455 = vmatprep.subr.mxu0 0.0
    %456 = vmatpush1.msra.mxu0 0.0
    %457 = vmatprep.subr.mxu0 0.0
    %458 = vmatpush1.msra.mxu0 0.0
    %459 = vmatprep.subr.mxu0 0.0
    %460 = vmatpush1.msra.mxu0 0.0
    %461 = vmatprep.subr.mxu0 0.0
    %462 = vmatpush1.msra.mxu0 0.0
    %463 = vmatprep.subr.mxu0 0.0
    %464 = vmatpush1.msra.mxu0 0.0
    %465 = vmatprep.subr.mxu0 0.0
    %466 = vmatpush1.msra.mxu0 0.0
    %467 = vmatprep.subr.mxu0 0.0
    %468 = vmatpush1.msra.mxu0 0.0
    %469 = vmatprep.subr.mxu0 0.0
    %470 = vmatpush1.msra.mxu0 0.0
    %471 = vmatprep.subr.mxu0 0.0
    %472 = vmatpush1.msra.mxu0 0.0
    %473 = vmatprep.subr.mxu0 0.0
    %474 = vmatpush1.msra.mxu0 0.0
    %475 = vmatprep.subr.mxu0 0.0
    %476 = vmatpush1.msra.mxu0 0.0
    %477 = vmatprep.subr.mxu0 0.0
    %478 = vmatpush1.msra.mxu0 0.0
    %479 = vmatprep.subr.mxu0 0.0
    %480 = vmatpush1.msra.mxu0 0.0
    %481 = vmatprep.subr.mxu0 0.0
    %482 = vmatpush1.msra.mxu0 0.0
    %483 = vmatprep.subr.mxu0 0.0
    %484 = vmatpush1.msra.mxu0 0.0
    %485 = vmatprep.subr.mxu0 0.0
    %486 = vmatpush1.msra.mxu0 0.0
    %487 = vmatprep.subr.mxu0 0.0
    %488 = vmatpush1.msra.mxu0 0.0
    %489 = vmatprep.mubr.f32.mxu0 0.0
    %490 = vmatmul.mubr.f32.gmra.mrb[0].mxu0 %v423
    %v491 = vpop.f32.mrb[0].mxu0
    %v492 = vadd.f32 0.0, %v491
    %v493 = vpop.f32.mrb[0].mxu0
    %494 = vdwg.mxu0
    %v495 = vld [vmem:[#allocation7 + $0x40] sm:$0xff]
    %v496 = vld [vmem:[#allocation7 + $0x48] sm:$0xff]
    %v497 = vld [vmem:[#allocation7 + $0x50] sm:$0xff]
    %v498 = vld [vmem:[#allocation7 + $0x58] sm:$0xff]
    %v499 = vld [vmem:[#allocation7 + $0x60] sm:$0xff]
    %v500 = vld [vmem:[#allocation7 + $0x68] sm:$0xff]
    %v501 = vld [vmem:[#allocation7 + $0x70] sm:$0xff]
    %v502 = vld [vmem:[#allocation7 + $0x78] sm:$0xff]
    %v503 = vmax.f32 %v302, 0.0
    %v504 = vmax.f32 %v492, 0.0
    %506 = vrot.lane.b32.xlu0 %v504, 32
    %v507 = vpop.permute.xlu0 %506
    %v509 = vsel %vm193, %v503, %v507
    %v510 = vlaneseq
    %v511 = vshrl.u32 %v510, 7
    %v512 = vsub.s32 1, %v511
    %v513 = vrot.slane %v202, %v512
    %v515 = vsel %vm227, %v509, 0
    %517 = vmatprep.subr.mxu0 0.0
    %518 = vmatpush1.msra.mxu0 %v495
    %519 = vmatprep.subr.mxu0 0.0
    %520 = vmatpush1.msra.mxu0 %v496
    %521 = vmatprep.subr.mxu0 0.0
    %522 = vmatpush1.msra.mxu0 %v497
    %523 = vmatprep.subr.mxu0 0.0
    %524 = vmatpush1.msra.mxu0 %v498
    %525 = vmatprep.subr.mxu0 0.0
    %526 = vmatpush1.msra.mxu0 %v499
    %527 = vmatprep.subr.mxu0 0.0
    %528 = vmatpush1.msra.mxu0 %v500
    %529 = vmatprep.subr.mxu0 0.0
    %530 = vmatpush1.msra.mxu0 %v501
    %531 = vmatprep.subr.mxu0 0.0
    %532 = vmatpush1.msra.mxu0 %v502
    %533 = vmatprep.subr.mxu0 0.0
    %534 = vmatpush1.msra.mxu0 0.0
    %535 = vmatprep.subr.mxu0 0.0
    %536 = vmatpush1.msra.mxu0 0.0
    %537 = vmatprep.subr.mxu0 0.0
    %538 = vmatpush1.msra.mxu0 0.0
    %539 = vmatprep.subr.mxu0 0.0
    %540 = vmatpush1.msra.mxu0 0.0
    %541 = vmatprep.subr.mxu0 0.0
    %542 = vmatpush1.msra.mxu0 0.0
    %543 = vmatprep.subr.mxu0 0.0
    %544 = vmatpush1.msra.mxu0 0.0
    %545 = vmatprep.subr.mxu0 0.0
    %546 = vmatpush1.msra.mxu0 0.0
    %547 = vmatprep.subr.mxu0 0.0
    %548 = vmatpush1.msra.mxu0 0.0
    %549 = vmatprep.subr.mxu0 0.0
    %550 = vmatpush1.msra.mxu0 0.0
    %551 = vmatprep.subr.mxu0 0.0
    %552 = vmatpush1.msra.mxu0 0.0
    %553 = vmatprep.subr.mxu0 0.0
    %554 = vmatpush1.msra.mxu0 0.0
    %555 = vmatprep.subr.mxu0 0.0
    %556 = vmatpush1.msra.mxu0 0.0
    %557 = vmatprep.subr.mxu0 0.0
    %558 = vmatpush1.msra.mxu0 0.0
    %559 = vmatprep.subr.mxu0 0.0
    %560 = vmatpush1.msra.mxu0 0.0
    %561 = vmatprep.subr.mxu0 0.0
    %562 = vmatpush1.msra.mxu0 0.0
    %563 = vmatprep.subr.mxu0 0.0
    %564 = vmatpush1.msra.mxu0 0.0
    %565 = vmatprep.subr.mxu0 0.0
    %566 = vmatpush1.msra.mxu0 0.0
    %567 = vmatprep.subr.mxu0 0.0
    %568 = vmatpush1.msra.mxu0 0.0
    %569 = vmatprep.subr.mxu0 0.0
    %570 = vmatpush1.msra.mxu0 0.0
    %571 = vmatprep.subr.mxu0 0.0
    %572 = vmatpush1.msra.mxu0 0.0
    %573 = vmatprep.subr.mxu0 0.0
    %574 = vmatpush1.msra.mxu0 0.0
    %575 = vmatprep.subr.mxu0 0.0
    %576 = vmatpush1.msra.mxu0 0.0
    %577 = vmatprep.subr.mxu0 0.0
    %578 = vmatpush1.msra.mxu0 0.0
    %579 = vmatprep.subr.mxu0 0.0
    %580 = vmatpush1.msra.mxu0 0.0
    %581 = vmatprep.mubr.f32.mxu0 0.0
    %582 = vmatmul.mubr.f32.gmra.mrb[0].mxu0 %v515
    %v583 = vpop.f32.mrb[0].mxu0
    %v584 = vadd.f32 %v513, %v583
    %v585 = vpop.f32.mrb[0].mxu0
    %586 = vdwg.mxu0
    %v587 = vmax.f32 %v584, 0.0
    %592 = vrot.lane.b32.xlu0 %v499, 56
    %v593 = vpop.permute.xlu0 %592
    %594 = vrot.lane.b32.xlu0 %v500, 56
    %v595 = vpop.permute.xlu0 %594
    %596 = vrot.lane.b32.xlu0 %v501, 56
    %v597 = vpop.permute.xlu0 %596
    %598 = vrot.lane.b32.xlu0 %v502, 56
    %v599 = vpop.permute.xlu0 %598
    %605 = vrot.lane.b32.xlu0 %v513, 96
    %v606 = vpop.permute.xlu0 %605
    %v609 = vsel %vm193, %v587, 0
    %611 = vmatprep.subr.mxu0 0.0
    %612 = vmatpush1.msra.mxu0 %v593
    %613 = vmatprep.subr.mxu0 0.0
    %614 = vmatpush1.msra.mxu0 %v595
    %615 = vmatprep.subr.mxu0 0.0
    %616 = vmatpush1.msra.mxu0 %v597
    %617 = vmatprep.subr.mxu0 0.0
    %618 = vmatpush1.msra.mxu0 %v599
    %619 = vmatprep.subr.mxu0 0.0
    %620 = vmatpush1.msra.mxu0 0.0
    %621 = vmatprep.subr.mxu0 0.0
    %622 = vmatpush1.msra.mxu0 0.0
    %623 = vmatprep.subr.mxu0 0.0
    %624 = vmatpush1.msra.mxu0 0.0
    %625 = vmatprep.subr.mxu0 0.0
    %626 = vmatpush1.msra.mxu0 0.0
    %627 = vmatprep.subr.mxu0 0.0
    %628 = vmatpush1.msra.mxu0 0.0
    %629 = vmatprep.subr.mxu0 0.0
    %630 = vmatpush1.msra.mxu0 0.0
    %631 = vmatprep.subr.mxu0 0.0
    %632 = vmatpush1.msra.mxu0 0.0
    %633 = vmatprep.subr.mxu0 0.0
    %634 = vmatpush1.msra.mxu0 0.0
    %635 = vmatprep.subr.mxu0 0.0
    %636 = vmatpush1.msra.mxu0 0.0
    %637 = vmatprep.subr.mxu0 0.0
    %638 = vmatpush1.msra.mxu0 0.0
    %639 = vmatprep.subr.mxu0 0.0
    %640 = vmatpush1.msra.mxu0 0.0
    %641 = vmatprep.subr.mxu0 0.0
    %642 = vmatpush1.msra.mxu0 0.0
    %643 = vmatprep.subr.mxu0 0.0
    %644 = vmatpush1.msra.mxu0 0.0
    %645 = vmatprep.subr.mxu0 0.0
    %646 = vmatpush1.msra.mxu0 0.0
    %647 = vmatprep.subr.mxu0 0.0
    %648 = vmatpush1.msra.mxu0 0.0
    %649 = vmatprep.subr.mxu0 0.0
    %650 = vmatpush1.msra.mxu0 0.0
    %651 = vmatprep.subr.mxu0 0.0
    %652 = vmatpush1.msra.mxu0 0.0
    %653 = vmatprep.subr.mxu0 0.0
    %654 = vmatpush1.msra.mxu0 0.0
    %655 = vmatprep.subr.mxu0 0.0
    %656 = vmatpush1.msra.mxu0 0.0
    %657 = vmatprep.subr.mxu0 0.0
    %658 = vmatpush1.msra.mxu0 0.0
    %659 = vmatprep.subr.mxu0 0.0
    %660 = vmatpush1.msra.mxu0 0.0
    %661 = vmatprep.subr.mxu0 0.0
    %662 = vmatpush1.msra.mxu0 0.0
    %663 = vmatprep.subr.mxu0 0.0
    %664 = vmatpush1.msra.mxu0 0.0
    %665 = vmatprep.subr.mxu0 0.0
    %666 = vmatpush1.msra.mxu0 0.0
    %667 = vmatprep.subr.mxu0 0.0
    %668 = vmatpush1.msra.mxu0 0.0
    %669 = vmatprep.subr.mxu0 0.0
    %670 = vmatpush1.msra.mxu0 0.0
    %671 = vmatprep.subr.mxu0 0.0
    %672 = vmatpush1.msra.mxu0 0.0
    %673 = vmatprep.subr.mxu0 0.0
    %674 = vmatpush1.msra.mxu0 0.0
    %675 = vmatprep.mubr.f32.mxu0 0.0
    %676 = vmatmul.mubr.f32.gmra.mrb[0].mxu0 %v609
    %v677 = vpop.f32.mrb[0].mxu0
    %v678 = vadd.f32 %v606, %v677
    %v679 = vpop.f32.mrb[0].mxu0
    %680 = vdwg.mxu0
    %v681 = vsel %vm193, %v492, 1.0
    %v682 = vsel %vm193, %v302, 1.0
    %687 = vrot.lane.b32.xlu0 %v495, 96
    %v688 = vpop.permute.xlu0 %687
    %689 = vrot.lane.b32.xlu0 %v496, 96
    %v690 = vpop.permute.xlu0 %689
    %691 = vrot.lane.b32.xlu0 %v497, 96
    %v692 = vpop.permute.xlu0 %691
    %693 = vrot.lane.b32.xlu0 %v498, 96
    %v694 = vpop.permute.xlu0 %693
    %695 = vrot.lane.b32.xlu0 %v499, 96
    %v696 = vpop.permute.xlu0 %695
    %vm701 = vcmask 269312
    %v703 = vsel %vm701, %v681, 0
    %v705 = vsel %vm107, %v696, 0
    %707 = vmatprep.subr.mxu0 0.0
    %708 = vmatpush1.msra.mxu0 %v688
    %709 = vmatprep.subr.mxu0 0.0
    %710 = vmatpush1.msra.mxu0 %v690
    %711 = vmatprep.subr.mxu0 0.0
    %712 = vmatpush1.msra.mxu0 %v692
    %713 = vmatprep.subr.mxu0 0.0
    %714 = vmatpush1.msra.mxu0 %v694
    %715 = vmatprep.subr.mxu0 0.0
    %716 = vmatpush1.msra.mxu0 %v705
    %717 = vmatprep.subr.mxu0 0.0
    %718 = vmatpush1.msra.mxu0 0.0
    %719 = vmatprep.subr.mxu0 0.0
    %720 = vmatpush1.msra.mxu0 0.0
    %721 = vmatprep.subr.mxu0 0.0
    %722 = vmatpush1.msra.mxu0 0.0
    %723 = vmatprep.subr.mxu0 0.0
    %724 = vmatpush1.msra.mxu0 0.0
    %725 = vmatprep.subr.mxu0 0.0
    %726 = vmatpush1.msra.mxu0 0.0
    %727 = vmatprep.subr.mxu0 0.0
    %728 = vmatpush1.msra.mxu0 0.0
    %729 = vmatprep.subr.mxu0 0.0
    %730 = vmatpush1.msra.mxu0 0.0
    %731 = vmatprep.subr.mxu0 0.0
    %732 = vmatpush1.msra.mxu0 0.0
    %733 = vmatprep.subr.mxu0 0.0
    %734 = vmatpush1.msra.mxu0 0.0
    %735 = vmatprep.subr.mxu0 0.0
    %736 = vmatpush1.msra.mxu0 0.0
    %737 = vmatprep.subr.mxu0 0.0
    %738 = vmatpush1.msra.mxu0 0.0
    %739 = vmatprep.subr.mxu0 0.0
    %740 = vmatpush1.msra.mxu0 0.0
    %741 = vmatprep.subr.mxu0 0.0
    %742 = vmatpush1.msra.mxu0 0.0
    %743 = vmatprep.subr.mxu0 0.0
    %744 = vmatpush1.msra.mxu0 0.0
    %745 = vmatprep.subr.mxu0 0.0
    %746 = vmatpush1.msra.mxu0 0.0
    %747 = vmatprep.subr.mxu0 0.0
    %748 = vmatpush1.msra.mxu0 0.0
    %749 = vmatprep.subr.mxu0 0.0
    %750 = vmatpush1.msra.mxu0 0.0
    %751 = vmatprep.subr.mxu0 0.0
    %752 = vmatpush1.msra.mxu0 0.0
    %753 = vmatprep.subr.mxu0 0.0
    %754 = vmatpush1.msra.mxu0 0.0
    %755 = vmatprep.subr.mxu0 0.0
    %756 = vmatpush1.msra.mxu0 0.0
    %757 = vmatprep.subr.mxu0 0.0
    %758 = vmatpush1.msra.mxu0 0.0
    %759 = vmatprep.subr.mxu0 0.0
    %760 = vmatpush1.msra.mxu0 0.0
    %761 = vmatprep.subr.mxu0 0.0
    %762 = vmatpush1.msra.mxu0 0.0
    %763 = vmatprep.subr.mxu0 0.0
    %764 = vmatpush1.msra.mxu0 0.0
    %765 = vmatprep.subr.mxu0 0.0
    %766 = vmatpush1.msra.mxu0 0.0
    %767 = vmatprep.subr.mxu0 0.0
    %768 = vmatpush1.msra.mxu0 0.0
    %769 = vmatprep.subr.mxu0 0.0
    %770 = vmatpush1.msra.mxu0 0.0
    %771 = vmatprep.mubr.f32.mxu0 0.0
    %772 = vmatmul.mubr.f32.gmra.mrb[0].mxu0 %v703
    %v773 = vpop.f32.mrb[0].mxu0
    %v774 = vadd.f32 0.0, %v773
    %v775 = vpop.f32.mrb[0].mxu0
    %776 = vdwg.mxu0
    %v777 = vmul.f32 %v774, %v682
    %vm778 = vcmask 263168
    %v779 = vsel %vm778, %v777, 0.0
    %780 = vadd.xlane.f32.xlu0 %v779
    %v781 = vpop.xlane.xlu0 %780
    %v782 = vxor.u32 %v781, 2147483648
    %v783 = vmul.f32 %v782, 1.442695
    %v784 = vpow.pop %v783
    %v785 = vadd.f32 %v784, 1.0
    %v786 = vrcp.pop %v785
    %v787 = vmul.f32 1.0, %v786
    %v788 = vsub.f32 1.0, %v787
    %vm789 = vcmask 7168
    %v790 = vsel %vm789, %v788, %v787
    %v791 = vmul.f32 %v492, %v788
    %v792 = vmul.f32 %v302, %v787
    %v793 = vadd.f32 %v791, %v792
    %794 = vrot.lane.b32.xlu0 %v495, 56
    %v795 = vpop.permute.xlu0 %794
    %796 = vrot.lane.b32.xlu0 %v496, 56
    %v797 = vpop.permute.xlu0 %796
    %798 = vrot.lane.b32.xlu0 %v497, 56
    %v799 = vpop.permute.xlu0 %798
    %800 = vrot.lane.b32.xlu0 %v498, 56
    %v801 = vpop.permute.xlu0 %800
    %806 = vrot.lane.b32.xlu0 %v513, 88
    %v807 = vpop.permute.xlu0 %806
    %v810 = vsel %vm193, %v793, 0
    %812 = vmatprep.subr.mxu0 0.0
    %813 = vmatpush1.msra.mxu0 %v795
    %814 = vmatprep.subr.mxu0 0.0
    %815 = vmatpush1.msra.mxu0 %v797
    %816 = vmatprep.subr.mxu0 0.0
    %817 = vmatpush1.msra.mxu0 %v799
    %818 = vmatprep.subr.mxu0 0.0
    %819 = vmatpush1.msra.mxu0 %v801
    %820 = vmatprep.subr.mxu0 0.0
    %821 = vmatpush1.msra.mxu0 0.0
    %822 = vmatprep.subr.mxu0 0.0
    %823 = vmatpush1.msra.mxu0 0.0
    %824 = vmatprep.subr.mxu0 0.0
    %825 = vmatpush1.msra.mxu0 0.0
    %826 = vmatprep.subr.mxu0 0.0
    %827 = vmatpush1.msra.mxu0 0.0
    %828 = vmatprep.subr.mxu0 0.0
    %829 = vmatpush1.msra.mxu0 0.0
    %830 = vmatprep.subr.mxu0 0.0
    %831 = vmatpush1.msra.mxu0 0.0
    %832 = vmatprep.subr.mxu0 0.0
    %833 = vmatpush1.msra.mxu0 0.0
    %834 = vmatprep.subr.mxu0 0.0
    %835 = vmatpush1.msra.mxu0 0.0
    %836 = vmatprep.subr.mxu0 0.0
    %837 = vmatpush1.msra.mxu0 0.0
    %838 = vmatprep.subr.mxu0 0.0
    %839 = vmatpush1.msra.mxu0 0.0
    %840 = vmatprep.subr.mxu0 0.0
    %841 = vmatpush1.msra.mxu0 0.0
    %842 = vmatprep.subr.mxu0 0.0
    %843 = vmatpush1.msra.mxu0 0.0
    %844 = vmatprep.subr.mxu0 0.0
    %845 = vmatpush1.msra.mxu0 0.0
    %846 = vmatprep.subr.mxu0 0.0
    %847 = vmatpush1.msra.mxu0 0.0
    %848 = vmatprep.subr.mxu0 0.0
    %849 = vmatpush1.msra.mxu0 0.0
    %850 = vmatprep.subr.mxu0 0.0
    %851 = vmatpush1.msra.mxu0 0.0
    %852 = vmatprep.subr.mxu0 0.0
    %853 = vmatpush1.msra.mxu0 0.0
    %854 = vmatprep.subr.mxu0 0.0
    %855 = vmatpush1.msra.mxu0 0.0
    %856 = vmatprep.subr.mxu0 0.0
    %857 = vmatpush1.msra.mxu0 0.0
    %858 = vmatprep.subr.mxu0 0.0
    %859 = vmatpush1.msra.mxu0 0.0
    %860 = vmatprep.subr.mxu0 0.0
    %861 = vmatpush1.msra.mxu0 0.0
    %862 = vmatprep.subr.mxu0 0.0
    %863 = vmatpush1.msra.mxu0 0.0
    %864 = vmatprep.subr.mxu0 0.0
    %865 = vmatpush1.msra.mxu0 0.0
    %866 = vmatprep.subr.mxu0 0.0
    %867 = vmatpush1.msra.mxu0 0.0
    %868 = vmatprep.subr.mxu0 0.0
    %869 = vmatpush1.msra.mxu0 0.0
    %870 = vmatprep.subr.mxu0 0.0
    %871 = vmatpush1.msra.mxu0 0.0
    %872 = vmatprep.subr.mxu0 0.0
    %873 = vmatpush1.msra.mxu0 0.0
    %874 = vmatprep.subr.mxu0 0.0
    %875 = vmatpush1.msra.mxu0 0.0
    %876 = vmatprep.mubr.f32.mxu0 0.0
    %877 = vmatmul.mubr.f32.gmra.mrb[0].mxu0 %v810
    %v878 = vpop.f32.mrb[0].mxu0
    %v879 = vadd.f32 %v807, %v878
    %v880 = vpop.f32.mrb[0].mxu0
    %881 = vdwg.mxu0
    %v882 = vmax.f32 %v879, 0.0
    %883 = vrot.lane.b32.xlu0 %v499, 40
    %v884 = vpop.permute.xlu0 %883
    %885 = vrot.lane.b32.xlu0 %v500, 40
    %v886 = vpop.permute.xlu0 %885
    %889 = vrot.lane.b32.xlu0 %v513, 72
    %v890 = vpop.permute.xlu0 %889
    %v893 = vsel %vm116, %v882, 0
    %895 = vmatprep.subr.mxu0 0.0
    %896 = vmatpush1.msra.mxu0 %v884
    %897 = vmatprep.subr.mxu0 0.0
    %898 = vmatpush1.msra.mxu0 %v886
    %899 = vmatprep.subr.mxu0 0.0
    %900 = vmatpush1.msra.mxu0 0.0
    %901 = vmatprep.subr.mxu0 0.0
    %902 = vmatpush1.msra.mxu0 0.0
    %903 = vmatprep.subr.mxu0 0.0
    %904 = vmatpush1.msra.mxu0 0.0
    %905 = vmatprep.subr.mxu0 0.0
    %906 = vmatpush1.msra.mxu0 0.0
    %907 = vmatprep.subr.mxu0 0.0
    %908 = vmatpush1.msra.mxu0 0.0
    %909 = vmatprep.subr.mxu0 0.0
    %910 = vmatpush1.msra.mxu0 0.0
    %911 = vmatprep.subr.mxu0 0.0
    %912 = vmatpush1.msra.mxu0 0.0
    %913 = vmatprep.subr.mxu0 0.0
    %914 = vmatpush1.msra.mxu0 0.0
    %915 = vmatprep.subr.mxu0 0.0
    %916 = vmatpush1.msra.mxu0 0.0
    %917 = vmatprep.subr.mxu0 0.0
    %918 = vmatpush1.msra.mxu0 0.0
    %919 = vmatprep.subr.mxu0 0.0
    %920 = vmatpush1.msra.mxu0 0.0
    %921 = vmatprep.subr.mxu0 0.0
    %922 = vmatpush1.msra.mxu0 0.0
    %923 = vmatprep.subr.mxu0 0.0
    %924 = vmatpush1.msra.mxu0 0.0
    %925 = vmatprep.subr.mxu0 0.0
    %926 = vmatpush1.msra.mxu0 0.0
    %927 = vmatprep.subr.mxu0 0.0
    %928 = vmatpush1.msra.mxu0 0.0
    %929 = vmatprep.subr.mxu0 0.0
    %930 = vmatpush1.msra.mxu0 0.0
    %931 = vmatprep.subr.mxu0 0.0
    %932 = vmatpush1.msra.mxu0 0.0
    %933 = vmatprep.subr.mxu0 0.0
    %934 = vmatpush1.msra.mxu0 0.0
    %935 = vmatprep.subr.mxu0 0.0
    %936 = vmatpush1.msra.mxu0 0.0
    %937 = vmatprep.subr.mxu0 0.0
    %938 = vmatpush1.msra.mxu0 0.0
    %939 = vmatprep.subr.mxu0 0.0
    %940 = vmatpush1.msra.mxu0 0.0
    %941 = vmatprep.subr.mxu0 0.0
    %942 = vmatpush1.msra.mxu0 0.0
    %943 = vmatprep.subr.mxu0 0.0
    %944 = vmatpush1.msra.mxu0 0.0
    %945 = vmatprep.subr.mxu0 0.0
    %946 = vmatpush1.msra.mxu0 0.0
    %947 = vmatprep.subr.mxu0 0.0
    %948 = vmatpush1.msra.mxu0 0.0
    %949 = vmatprep.subr.mxu0 0.0
    %950 = vmatpush1.msra.mxu0 0.0
    %951 = vmatprep.subr.mxu0 0.0
    %952 = vmatpush1.msra.mxu0 0.0
    %953 = vmatprep.subr.mxu0 0.0
    %954 = vmatpush1.msra.mxu0 0.0
    %955 = vmatprep.subr.mxu0 0.0
    %956 = vmatpush1.msra.mxu0 0.0
    %957 = vmatprep.subr.mxu0 0.0
    %958 = vmatpush1.msra.mxu0 0.0
    %959 = vmatprep.mubr.f32.mxu0 0.0
    %960 = vmatmul.mubr.f32.gmra.mrb[0].mxu0 %v893
    %v961 = vpop.f32.mrb[0].mxu0
    %v962 = vadd.f32 %v890, %v961
    %v963 = vpop.f32.mrb[0].mxu0
    %964 = vdwg.mxu0
    %966 = vrot.lane.b32.xlu0 %v678, 4
    %v967 = vpop.permute.xlu0 %966
    %970 = vrot.lane.b32.xlu0 %v790, 12
    %v971 = vpop.permute.xlu0 %970
    %vm973 = vcmask 31744
    %v974 = vsel %vm973, %v962, %v967
    %vm975 = vcmask 97280
    %v976 = vsel %vm975, %v974, %v971
    %vm977 = vcmask 113664
    %v978 = vsel %vm977, %v976, 0.0
    %v979 = vsel %vm109, %v978, 0.0
    %980 = vst [vmem:[#allocation9] sm:$0xff] %v979
    // Predicated region
    $region26: #{tpu_custom_call.1} parent=1 // pred_check
      _
    $region27: #{tpu_custom_call.1} parent=1 // pred_check_branch
      %982 = sbr.rel (0) target = $region29
    $region28: #{tpu_custom_call.1} parent=1 // pred_region
      %s984 = ssub.s32 128, 128
      %985 = vsyncadd [#allocation4], %s984
      %s987 = sshll.u32 [#allocation9], 4
      %s988 = int_to_ptr.vmem [resolvable:$true] %s987
      %990 = dma.vmem_to_hbm [thread:$0]  %s988, 128, %s3, [#allocation4]
    $region29: #{tpu_custom_call.1} parent=1 // pred_fallthru
      _
    // Predicated region
    $region30: #{tpu_custom_call.1} parent=1 // pred_check
      _
    $region31: #{tpu_custom_call.1} parent=1 // pred_check_branch
      %992 = sbr.rel (0) target = $region33
    $region32: #{tpu_custom_call.1} parent=1 // pred_region
      %993 = dma.done [#allocation4], 128
    $region33: #{tpu_custom_call.1} parent=1 // pred_fallthru
      _
    %994 = vsyncpa [#allocation3], 1
    %995 = vsyncpa [#allocation8], 1
    %996 = vsyncpa [#allocation4], 1
    %997 = vsyncpa [#allocation5], 1

</llo_original>
